<compile_context>
chip_gen: v7x
topology: tpu7x:2x2x1
jax: 0.10.0
libtpu: 0.0.40
codegen_flags: <defaults>
</compile_context>

<pallas_src>
import jax
import jax.numpy as jnp
from jax import lax
from jax.experimental import pallas as pl
from jax.experimental.pallas import tpu as pltpu


# ---------------------------------------------------------------------------
# Kernel
# ---------------------------------------------------------------------------
def _double_conv_kernel(x_ref, t1_ref, b1_ref, t2_ref, b2_ref, o_ref,
                        pad1_ref, pad2_ref):
    """B_TILE batch elements per grid step.

    x_ref:   (B, H, W*Cin)        lane-flattened NHWC input (bf16)
    t1_ref:  (3, W*Cin,  W*Cout)  row-Toeplitz weights, stage 1 (bf16, BN folded)
    b1_ref:  (1, W*Cout)          fused BN/conv bias, stage 1 (f32)
    t2_ref:  (3, W*Cout, W*Cout)  row-Toeplitz weights, stage 2 (bf16)
    b2_ref:  (1, W*Cout)          fused bias, stage 2 (f32)
    o_ref:   (B, H, W*Cout)       lane-flattened NHWC output (bf16/f32)
    pad*_ref:(B, H+2, W*C)        bf16 VMEM zero-padded row slabs (scratch)
    """
    bt, hp2, wcin = pad1_ref.shape
    h = hp2 - 2
    wcout = pad2_ref.shape[2]
    m = bt * h

    # Zero halo rows every step.  (Scratch persists across grid steps, but an
    # init-once guard on pl.program_id(0)==0 would be WRONG under
    # dimension_semantics=("parallel",) on multi-TensorCore parts: cores other
    # than core 0 never see program_id 0, so their slabs would keep garbage
    # halos.  Four single-row stores per step are negligible next to the six
    # MXU matmuls.)
    zero1 = jnp.zeros((bt, 1, wcin), pad1_ref.dtype)
    zero2 = jnp.zeros((bt, 1, wcout), pad2_ref.dtype)
    pad1_ref[:, 0:1, :] = zero1
    pad1_ref[:, h + 1:h + 2, :] = zero1
    pad2_ref[:, 0:1, :] = zero2
    pad2_ref[:, h + 1:h + 2, :] = zero2

    def stage(pad_ref, t_ref, bias_ref):
        """Conv3x3 (+BN-folded bias) + ReLU over a zero-padded bf16 row slab."""
        k = pad_ref.shape[2]
        # 3 lane-dense MXU matmuls (one per kernel row), K = W*C_in_stage,
        # M = B_TILE*H, f32 accumulation.
        # TODO(synk): on v6e/v7x the three dy taps could be concatenated along
        # K (LHS (M, 3K) x weight (3K, N), one dot per stage) to better fill
        # the 256-deep MXU; skipped here because the lane-concat costs extra
        # store traffic on v5e's single vst slot for little gain there.
        acc = jnp.dot(pad_ref[:, 0:h, :].reshape(m, k), t_ref[0],
                      preferred_element_type=jnp.float32)
        acc = acc + jnp.dot(pad_ref[:, 1:h + 1, :].reshape(m, k), t_ref[1],
                            preferred_element_type=jnp.float32)
        acc = acc + jnp.dot(pad_ref[:, 2:h + 2, :].reshape(m, k), t_ref[2],
                            preferred_element_type=jnp.float32)
        # Fused (BN-folded) bias + ReLU epilogue.
        return jnp.maximum(acc + bias_ref[...], 0.0)          # (M, N) f32

    # Stage 1: fill the slab interior straight from the bf16 input block.
    pad1_ref[:, 1:h + 1, :] = x_ref[...]
    y = stage(pad1_ref, t1_ref, b1_ref)                       # (M, W*Cout) f32
    # Intermediate activation stays on-chip: one bf16 re-quantization into the
    # stage-2 slab interior (never touches HBM).
    pad2_ref[:, 1:h + 1, :] = y.reshape(bt, h, wcout).astype(pad2_ref.dtype)
    z = stage(pad2_ref, t2_ref, b2_ref)                       # (M, W*Cout) f32
    o_ref[...] = z.reshape(bt, h, wcout).astype(o_ref.dtype)


# ---------------------------------------------------------------------------
# Weight preprocessing (wrapper side, tiny)
# ---------------------------------------------------------------------------
def _fold_bn_into_conv(w_hwio, conv_b, gamma, beta, mean, var, eps=1e-5):
    """Fold eval-mode BatchNorm into the conv weights / bias."""
    scale = gamma / jnp.sqrt(var + eps)                 # (Cout,)
    w_folded = w_hwio * scale[None, None, None, :]
    bias = beta + scale * (conv_b - mean)               # (Cout,)
    return w_folded, bias


def _row_toeplitz(w_hwio, width, dtype):
    """(3,3,Cin,Cout) conv weights -> (3, W*Cin, W*Cout) row-Toeplitz weights.

    T[dy, jp*Cin+ci, j*Cout+co] = w[dy, jp-j+1, ci, co] if 0 <= jp-j+1 <= 2
    else 0: the dx window shifts AND the zero padding along W are folded into
    a single matmul contraction.
    """
    _, _, cin, cout = w_hwio.shape
    jp = jnp.arange(width)[:, None]                     # input column
    j = jnp.arange(width)[None, :]                      # output column
    dx = jp - j + 1
    valid = ((dx >= 0) & (dx <= 2)).astype(w_hwio.dtype)
    t = w_hwio[:, jnp.clip(dx, 0, 2)]                   # (3, W, W, Cin, Cout)
    t = t * valid[None, :, :, None, None]
    t = jnp.transpose(t, (0, 1, 3, 2, 4))               # (dy, jp, ci, j, co)
    return t.reshape(3, width * cin, width * cout).astype(dtype)


def _pick_batch_tile(n, h, target_m=256):
    """Largest divisor of n with B_tile*H <= target_m while keeping >= 2 grid
    steps (so v7x megacore still gets both TensorCores / pipeline overlap)."""
    best = 1
    for b in range(1, n + 1):
        if n % b != 0 or b * h > target_m:
            continue
        if n // b >= 2 or b == 1:
            best = b
    return best


# ---------------------------------------------------------------------------
# Pallas wrapper (NHWC in / NHWC out) -- the performance path
# ---------------------------------------------------------------------------
def double_conv_nhwc(x_nhwc, w1, b1, bn1, w2, b2, bn2,
                     compute_dtype=jnp.bfloat16, out_dtype=jnp.bfloat16):
    n, h, w, cin = x_nhwc.shape
    cout = w1.shape[-1]

    w1f, bias1 = _fold_bn_into_conv(w1, b1, *bn1)
    w2f, bias2 = _fold_bn_into_conv(w2, b2, *bn2)
    t1 = _row_toeplitz(w1f, w, compute_dtype)            # (3, W*Cin,  W*Cout)
    t2 = _row_toeplitz(w2f, w, compute_dtype)            # (3, W*Cout, W*Cout)
    b1_flat = jnp.tile(bias1, w).reshape(1, w * cout).astype(jnp.float32)
    b2_flat = jnp.tile(bias2, w).reshape(1, w * cout).astype(jnp.float32)

    # Lane-dense, bf16 activations; no spatial pre-padding (H halo rows are
    # zeroed in-kernel, W padding lives in the Toeplitz weights).
    x_flat = x_nhwc.reshape(n, h, w * cin).astype(compute_dtype)

    bt = _pick_batch_tile(n, h)
    grid = (n // bt,)

    # TODO(synk): for real UNet feature-map sizes, tile H (2-row halo) and W
    # so the (Wt*C, Wt*C) Toeplitz blocks (ideally single-buffered) plus the
    # double-buffered activation tiles and both bf16 slabs fit the
    # per-generation scoped-VMEM budget (32 MiB on v7x); at these test shapes
    # whole images per step fit comfortably.
    out_flat = pl.pallas_call(
        _double_conv_kernel,
        out_shape=jax.ShapeDtypeStruct((n, h, w * cout), out_dtype),
        grid_spec=pltpu.PrefetchScalarGridSpec(
            num_scalar_prefetch=0,
            grid=grid,
            in_specs=[
                pl.BlockSpec((bt, h, w * cin), lambda i: (i, 0, 0)),
                pl.BlockSpec((3, w * cin, w * cout), lambda i: (0, 0, 0)),
                pl.BlockSpec((1, w * cout), lambda i: (0, 0)),
                pl.BlockSpec((3, w * cout, w * cout), lambda i: (0, 0, 0)),
                pl.BlockSpec((1, w * cout), lambda i: (0, 0)),
            ],
            out_specs=pl.BlockSpec((bt, h, w * cout), lambda i: (i, 0, 0)),
            scratch_shapes=[
                pltpu.VMEM((bt, h + 2, w * cin), compute_dtype),
                pltpu.VMEM((bt, h + 2, w * cout), compute_dtype),
            ],
        ),
        compiler_params=pltpu.CompilerParams(
            dimension_semantics=("parallel",)),
    )(x_flat, t1, b1_flat, t2, b2_flat)
    return out_flat.reshape(n, h, w, cout)


@jax.jit
def double_conv_forward(x_nchw, params):
    """NCHW in / NCHW out (PyTorch interface parity only).

    The NCHW<->NHWC transposes are full HBM round trips of the activation;
    a real NHWC-resident UNet should call double_conv_nhwc directly."""
    (w1, b1, g1, be1, m1, v1, w2, b2, g2, be2, m2, v2) = params
    x = jnp.transpose(x_nchw, (0, 2, 3, 1))             # NCHW -> NHWC
    y = double_conv_nhwc(x, w1, b1, (g1, be1, m1, v1),
                         w2, b2, (g2, be2, m2, v2))
    return jnp.transpose(y, (0, 3, 1, 2))               # NHWC -> NCHW


# ---------------------------------------------------------------------------
# Module wrapper + reference
# ---------------------------------------------------------------------------
class DoubleConvPallas:
    """(Conv3x3 pad=1 => BatchNorm(eval) => ReLU) * 2, NCHW in / NCHW out."""
    # TODO(synk): BatchNorm is applied with inference (running-stat) semantics;
    # training-mode batch-statistics updates are not implemented.

    def __init__(self, in_channels, out_channels, key):
        ks = jax.random.split(key, 8)

        def conv_w(k, cin, cout):
            bound = 1.0 / jnp.sqrt(cin * 9.0)
            return jax.random.uniform(k, (3, 3, cin, cout), jnp.float32,
                                      -bound, bound)

        self.w1 = conv_w(ks[0], in_channels, out_channels)
        self.b1 = jax.random.uniform(ks[1], (out_channels,), jnp.float32,
                                     -0.1, 0.1)
        self.w2 = conv_w(ks[2], out_channels, out_channels)
        self.b2 = jax.random.uniform(ks[3], (out_channels,), jnp.float32,
                                     -0.1, 0.1)
        self.g1 = 1.0 + 0.1 * jax.random.normal(ks[4], (out_channels,))
        self.be1 = 0.1 * jax.random.normal(ks[5], (out_channels,))
        self.m1 = jnp.zeros((out_channels,), jnp.float32)
        self.v1 = jnp.ones((out_channels,), jnp.float32)
        self.g2 = 1.0 + 0.1 * jax.random.normal(ks[6], (out_channels,))
        self.be2 = 0.1 * jax.random.normal(ks[7], (out_channels,))
        self.m2 = jnp.zeros((out_channels,), jnp.float32)
        self.v2 = jnp.ones((out_channels,), jnp.float32)

    @property
    def params(self):
        return (self.w1, self.b1, self.g1, self.be1, self.m1, self.v1,
                self.w2, self.b2, self.g2, self.be2, self.m2, self.v2)

    def __call__(self, x_nchw):
        return double_conv_forward(x_nchw, self.params)

    # Pure-JAX f32 reference (lax conv) for the correctness check.
    def reference(self, x_nchw):
        def conv_bn_relu_ref(x, w_hwio, b, g, be, m, v):
            w_oihw = jnp.transpose(w_hwio, (3, 2, 0, 1))
            y = lax.conv_general_dilated(
                x, w_oihw, window_strides=(1, 1), padding="SAME",
                dimension_numbers=("NCHW", "OIHW", "NCHW"),
                precision=lax.Precision.HIGHEST)
            y = y + b[None, :, None, None]
            y = (y - m[None, :, None, None]) / jnp.sqrt(
                v[None, :, None, None] + 1e-5)
            y = y * g[None, :, None, None] + be[None, :, None, None]
            return jnp.maximum(y, 0.0)

        y = conv_bn_relu_ref(x_nchw, self.w1, self.b1, self.g1, self.be1,
                             self.m1, self.v1)
        y = conv_bn_relu_ref(y, self.w2, self.b2, self.g2, self.be2,
                             self.m2, self.v2)
        return y


if __name__ == "__main__":
    key = jax.random.PRNGKey(0)
    k_in, k_params = jax.random.split(key)

    N, Cin, Cout, H, W = 2, 4, 8, 16, 16
    x = jax.random.normal(k_in, (N, Cin, H, W), jnp.float32)

    model = DoubleConvPallas(Cin, Cout, k_params)

    out = jax.block_until_ready(model(x))
    ref = jax.block_until_ready(model.reference(x))

    assert out.shape == (N, Cout, H, W)
    out_f32 = out.astype(jnp.float32)
    max_err = float(jnp.max(jnp.abs(out_f32 - ref)))
    # bf16 MXU inputs + bf16 intermediate/output vs. f32 reference.
    assert jnp.allclose(out_f32, ref, atol=6e-2, rtol=6e-2), max_err

    print("KERNEL_OK")
</pallas_src>

<mosaic_0001>
module attributes {stable_mosaic.version = 11 : i64} {
  func.func @_double_conv_kernel(%arg0: i32, %arg1: memref<1x16x64xbf16, #tpu.memory_space<vmem>>, %arg2: memref<3x64x128xbf16, #tpu.memory_space<vmem>>, %arg3: memref<1x128xf32, #tpu.memory_space<vmem>>, %arg4: memref<3x128x128xbf16, #tpu.memory_space<vmem>>, %arg5: memref<1x128xf32, #tpu.memory_space<vmem>>, %arg6: memref<1x16x128xbf16, #tpu.memory_space<vmem>>, %arg7: memref<1x18x64xbf16, #tpu.memory_space<vmem>>, %arg8: memref<1x18x128xbf16, #tpu.memory_space<vmem>>) attributes {dimension_semantics = [#tpu.dimension_semantics<parallel>], iteration_bounds = array<i64: 2>, scalar_prefetch = 0 : i64, scratch_operands = 2 : i64, tpu.core_type = #tpu.core_type<tc>, window_params = [{transform_indices = @transform_0, window_bounds = array<i64: 1, 16, 64>}, {pipeline_mode = #tpu.pipeline_mode<synchronous>, transform_indices = @transform_1, window_bounds = array<i64: 3, 64, 128>}, {pipeline_mode = #tpu.pipeline_mode<synchronous>, transform_indices = @transform_2, window_bounds = array<i64: 1, 128>}, {pipeline_mode = #tpu.pipeline_mode<synchronous>, transform_indices = @transform_3, window_bounds = array<i64: 3, 128, 128>}, {pipeline_mode = #tpu.pipeline_mode<synchronous>, transform_indices = @transform_4, window_bounds = array<i64: 1, 128>}, {transform_indices = @transform_5, window_bounds = array<i64: 1, 16, 128>}]} {
    %cst = arith.constant 0.000000e+00 : bf16
    %0 = vector.broadcast %cst : bf16 to vector<1x1x64xbf16>
    %cst_0 = arith.constant 0.000000e+00 : bf16
    %1 = vector.broadcast %cst_0 : bf16 to vector<1x1x128xbf16>
    %c0 = arith.constant 0 : index
    %c0_1 = arith.constant 0 : index
    %c0_2 = arith.constant 0 : index
    %2 = vector.load %arg7[%c0, %c0_1, %c0_2] : memref<1x18x64xbf16, #tpu.memory_space<vmem>>, vector<1x1x64xbf16>
    tpu.vector_store %arg7[%c0, %c0_1, %c0_2], %0 {strides = array<i32>} : memref<1x18x64xbf16, #tpu.memory_space<vmem>>, vector<1x1x64xbf16>,
    %c0_3 = arith.constant 0 : index
    %c17 = arith.constant 17 : index
    %c0_4 = arith.constant 0 : index
    %3 = vector.load %arg7[%c0_3, %c17, %c0_4] : memref<1x18x64xbf16, #tpu.memory_space<vmem>>, vector<1x1x64xbf16>
    tpu.vector_store %arg7[%c0_3, %c17, %c0_4], %0 {strides = array<i32>} : memref<1x18x64xbf16, #tpu.memory_space<vmem>>, vector<1x1x64xbf16>,
    %c0_5 = arith.constant 0 : index
    %c0_6 = arith.constant 0 : index
    %c0_7 = arith.constant 0 : index
    %4 = vector.load %arg8[%c0_5, %c0_6, %c0_7] : memref<1x18x128xbf16, #tpu.memory_space<vmem>>, vector<1x1x128xbf16>
    tpu.vector_store %arg8[%c0_5, %c0_6, %c0_7], %1 {strides = array<i32>} : memref<1x18x128xbf16, #tpu.memory_space<vmem>>, vector<1x1x128xbf16>,
    %c0_8 = arith.constant 0 : index
    %c17_9 = arith.constant 17 : index
    %c0_10 = arith.constant 0 : index
    %5 = vector.load %arg8[%c0_8, %c17_9, %c0_10] : memref<1x18x128xbf16, #tpu.memory_space<vmem>>, vector<1x1x128xbf16>
    tpu.vector_store %arg8[%c0_8, %c17_9, %c0_10], %1 {strides = array<i32>} : memref<1x18x128xbf16, #tpu.memory_space<vmem>>, vector<1x1x128xbf16>,
    %c0_11 = arith.constant 0 : index
    %c0_12 = arith.constant 0 : index
    %c0_13 = arith.constant 0 : index
    %6 = vector.load %arg1[%c0_11, %c0_12, %c0_13] : memref<1x16x64xbf16, #tpu.memory_space<vmem>>, vector<1x16x64xbf16>
    %c0_14 = arith.constant 0 : index
    %c1 = arith.constant 1 : index
    %c0_15 = arith.constant 0 : index
    %7 = vector.load %arg7[%c0_14, %c1, %c0_15] : memref<1x18x64xbf16, #tpu.memory_space<vmem>>, vector<1x16x64xbf16>
    tpu.vector_store %arg7[%c0_14, %c1, %c0_15], %6 {strides = array<i32>} : memref<1x18x64xbf16, #tpu.memory_space<vmem>>, vector<1x16x64xbf16>,
    %c0_16 = arith.constant 0 : index
    %c0_17 = arith.constant 0 : index
    %c0_18 = arith.constant 0 : index
    %8 = vector.load %arg7[%c0_16, %c0_17, %c0_18] : memref<1x18x64xbf16, #tpu.memory_space<vmem>>, vector<1x16x64xbf16>
    %9 = vector.shape_cast %8 : vector<1x16x64xbf16> to vector<16x64xbf16>
    %c0_19 = arith.constant 0 : index
    %c0_20 = arith.constant 0 : index
    %c0_21 = arith.constant 0 : index
    %10 = vector.load %arg2[%c0_19, %c0_20, %c0_21] : memref<3x64x128xbf16, #tpu.memory_space<vmem>>, vector<1x64x128xbf16>
    %11 = vector.shape_cast %10 : vector<1x64x128xbf16> to vector<64x128xbf16>
    %cst_22 = arith.constant dense<0.000000e+00> : vector<16x128xf32>
    %12 = tpu.matmul %9, %11, %cst_22 {dimension_numbers = #tpu.dot_dimension_numbers<[1], [0], [0], [1], [0, 0, 1, 1], [], []>} : vector<16x64xbf16>, vector<64x128xbf16>, vector<16x128xf32> -> vector<16x128xf32>
    %c0_23 = arith.constant 0 : index
    %c1_24 = arith.constant 1 : index
    %c0_25 = arith.constant 0 : index
    %13 = vector.load %arg7[%c0_23, %c1_24, %c0_25] : memref<1x18x64xbf16, #tpu.memory_space<vmem>>, vector<1x16x64xbf16>
    %14 = vector.shape_cast %13 : vector<1x16x64xbf16> to vector<16x64xbf16>
    %c1_26 = arith.constant 1 : index
    %c0_27 = arith.constant 0 : index
    %c0_28 = arith.constant 0 : index
    %15 = vector.load %arg2[%c1_26, %c0_27, %c0_28] : memref<3x64x128xbf16, #tpu.memory_space<vmem>>, vector<1x64x128xbf16>
    %16 = vector.shape_cast %15 : vector<1x64x128xbf16> to vector<64x128xbf16>
    %cst_29 = arith.constant dense<0.000000e+00> : vector<16x128xf32>
    %17 = tpu.matmul %14, %16, %cst_29 {dimension_numbers = #tpu.dot_dimension_numbers<[1], [0], [0], [1], [0, 0, 1, 1], [], []>} : vector<16x64xbf16>, vector<64x128xbf16>, vector<16x128xf32> -> vector<16x128xf32>
    %18 = arith.addf %12, %17 : vector<16x128xf32>
    %c0_30 = arith.constant 0 : index
    %c2 = arith.constant 2 : index
    %c0_31 = arith.constant 0 : index
    %19 = vector.load %arg7[%c0_30, %c2, %c0_31] : memref<1x18x64xbf16, #tpu.memory_space<vmem>>, vector<1x16x64xbf16>
    %20 = vector.shape_cast %19 : vector<1x16x64xbf16> to vector<16x64xbf16>
    %c2_32 = arith.constant 2 : index
    %c0_33 = arith.constant 0 : index
    %c0_34 = arith.constant 0 : index
    %21 = vector.load %arg2[%c2_32, %c0_33, %c0_34] : memref<3x64x128xbf16, #tpu.memory_space<vmem>>, vector<1x64x128xbf16>
    %22 = vector.shape_cast %21 : vector<1x64x128xbf16> to vector<64x128xbf16>
    %cst_35 = arith.constant dense<0.000000e+00> : vector<16x128xf32>
    %23 = tpu.matmul %20, %22, %cst_35 {dimension_numbers = #tpu.dot_dimension_numbers<[1], [0], [0], [1], [0, 0, 1, 1], [], []>} : vector<16x64xbf16>, vector<64x128xbf16>, vector<16x128xf32> -> vector<16x128xf32>
    %24 = arith.addf %18, %23 : vector<16x128xf32>
    %c0_36 = arith.constant 0 : index
    %c0_37 = arith.constant 0 : index
    %25 = vector.load %arg3[%c0_36, %c0_37] : memref<1x128xf32, #tpu.memory_space<vmem>>, vector<1x128xf32>
    %26 = vector.broadcast %25 : vector<1x128xf32> to vector<16x128xf32>
    %27 = arith.addf %24, %26 : vector<16x128xf32>
    %cst_38 = arith.constant 0.000000e+00 : f32
    %28 = vector.broadcast %cst_38 : f32 to vector<16x128xf32>
    %29 = arith.maximumf %27, %28 : vector<16x128xf32>
    %30 = vector.shape_cast %29 : vector<16x128xf32> to vector<1x16x128xf32>
    %31 = arith.truncf %30 : vector<1x16x128xf32> to vector<1x16x128xbf16>
    %c0_39 = arith.constant 0 : index
    %c1_40 = arith.constant 1 : index
    %c0_41 = arith.constant 0 : index
    %32 = vector.load %arg8[%c0_39, %c1_40, %c0_41] : memref<1x18x128xbf16, #tpu.memory_space<vmem>>, vector<1x16x128xbf16>
    tpu.vector_store %arg8[%c0_39, %c1_40, %c0_41], %31 {strides = array<i32>} : memref<1x18x128xbf16, #tpu.memory_space<vmem>>, vector<1x16x128xbf16>,
    %c0_42 = arith.constant 0 : index
    %c0_43 = arith.constant 0 : index
    %c0_44 = arith.constant 0 : index
    %33 = vector.load %arg8[%c0_42, %c0_43, %c0_44] : memref<1x18x128xbf16, #tpu.memory_space<vmem>>, vector<1x16x128xbf16>
    %34 = vector.shape_cast %33 : vector<1x16x128xbf16> to vector<16x128xbf16>
    %c0_45 = arith.constant 0 : index
    %c0_46 = arith.constant 0 : index
    %c0_47 = arith.constant 0 : index
    %35 = vector.load %arg4[%c0_45, %c0_46, %c0_47] : memref<3x128x128xbf16, #tpu.memory_space<vmem>>, vector<1x128x128xbf16>
    %36 = vector.shape_cast %35 : vector<1x128x128xbf16> to vector<128x128xbf16>
    %cst_48 = arith.constant dense<0.000000e+00> : vector<16x128xf32>
    %37 = tpu.matmul %34, %36, %cst_48 {dimension_numbers = #tpu.dot_dimension_numbers<[1], [0], [0], [1], [0, 0, 1, 1], [], []>} : vector<16x128xbf16>, vector<128x128xbf16>, vector<16x128xf32> -> vector<16x128xf32>
    %c0_49 = arith.constant 0 : index
    %c1_50 = arith.constant 1 : index
    %c0_51 = arith.constant 0 : index
    %38 = vector.load %arg8[%c0_49, %c1_50, %c0_51] : memref<1x18x128xbf16, #tpu.memory_space<vmem>>, vector<1x16x128xbf16>
    %39 = vector.shape_cast %38 : vector<1x16x128xbf16> to vector<16x128xbf16>
    %c1_52 = arith.constant 1 : index
    %c0_53 = arith.constant 0 : index
    %c0_54 = arith.constant 0 : index
    %40 = vector.load %arg4[%c1_52, %c0_53, %c0_54] : memref<3x128x128xbf16, #tpu.memory_space<vmem>>, vector<1x128x128xbf16>
    %41 = vector.shape_cast %40 : vector<1x128x128xbf16> to vector<128x128xbf16>
    %cst_55 = arith.constant dense<0.000000e+00> : vector<16x128xf32>
    %42 = tpu.matmul %39, %41, %cst_55 {dimension_numbers = #tpu.dot_dimension_numbers<[1], [0], [0], [1], [0, 0, 1, 1], [], []>} : vector<16x128xbf16>, vector<128x128xbf16>, vector<16x128xf32> -> vector<16x128xf32>
    %43 = arith.addf %37, %42 : vector<16x128xf32>
    %c0_56 = arith.constant 0 : index
    %c2_57 = arith.constant 2 : index
    %c0_58 = arith.constant 0 : index
    %44 = vector.load %arg8[%c0_56, %c2_57, %c0_58] : memref<1x18x128xbf16, #tpu.memory_space<vmem>>, vector<1x16x128xbf16>
    %45 = vector.shape_cast %44 : vector<1x16x128xbf16> to vector<16x128xbf16>
    %c2_59 = arith.constant 2 : index
    %c0_60 = arith.constant 0 : index
    %c0_61 = arith.constant 0 : index
    %46 = vector.load %arg4[%c2_59, %c0_60, %c0_61] : memref<3x128x128xbf16, #tpu.memory_space<vmem>>, vector<1x128x128xbf16>
    %47 = vector.shape_cast %46 : vector<1x128x128xbf16> to vector<128x128xbf16>
    %cst_62 = arith.constant dense<0.000000e+00> : vector<16x128xf32>
    %48 = tpu.matmul %45, %47, %cst_62 {dimension_numbers = #tpu.dot_dimension_numbers<[1], [0], [0], [1], [0, 0, 1, 1], [], []>} : vector<16x128xbf16>, vector<128x128xbf16>, vector<16x128xf32> -> vector<16x128xf32>
    %49 = arith.addf %43, %48 : vector<16x128xf32>
    %c0_63 = arith.constant 0 : index
    %c0_64 = arith.constant 0 : index
    %50 = vector.load %arg5[%c0_63, %c0_64] : memref<1x128xf32, #tpu.memory_space<vmem>>, vector<1x128xf32>
    %51 = vector.broadcast %50 : vector<1x128xf32> to vector<16x128xf32>
    %52 = arith.addf %49, %51 : vector<16x128xf32>
    %cst_65 = arith.constant 0.000000e+00 : f32
    %53 = vector.broadcast %cst_65 : f32 to vector<16x128xf32>
    %54 = arith.maximumf %52, %53 : vector<16x128xf32>
    %55 = vector.shape_cast %54 : vector<16x128xf32> to vector<1x16x128xf32>
    %56 = arith.truncf %55 : vector<1x16x128xf32> to vector<1x16x128xbf16>
    %c0_66 = arith.constant 0 : index
    %c0_67 = arith.constant 0 : index
    %c0_68 = arith.constant 0 : index
    %57 = vector.load %arg6[%c0_66, %c0_67, %c0_68] : memref<1x16x128xbf16, #tpu.memory_space<vmem>>, vector<1x16x128xbf16>
    tpu.vector_store %arg6[%c0_66, %c0_67, %c0_68], %56 {strides = array<i32>} : memref<1x16x128xbf16, #tpu.memory_space<vmem>>, vector<1x16x128xbf16>,
    return
  }
  func.func @transform_0(%arg0: i32) -> (i32, i32, i32) {
    %c0_i32 = arith.constant 0 : i32
    %c0_i32_0 = arith.constant 0 : i32
    %c0_i32_1 = arith.constant 0 : i32
    return %arg0, %c0_i32, %c0_i32_0 : i32, i32, i32
  }
  func.func @transform_1(%arg0: i32) -> (i32, i32, i32) {
    %c0_i32 = arith.constant 0 : i32
    %c0_i32_0 = arith.constant 0 : i32
    %c0_i32_1 = arith.constant 0 : i32
    %c0_i32_2 = arith.constant 0 : i32
    return %c0_i32, %c0_i32_0, %c0_i32_1 : i32, i32, i32
  }
  func.func @transform_2(%arg0: i32) -> (i32, i32) {
    %c0_i32 = arith.constant 0 : i32
    %c0_i32_0 = arith.constant 0 : i32
    %c0_i32_1 = arith.constant 0 : i32
    return %c0_i32, %c0_i32_0 : i32, i32
  }
  func.func @transform_3(%arg0: i32) -> (i32, i32, i32) {
    %c0_i32 = arith.constant 0 : i32
    %c0_i32_0 = arith.constant 0 : i32
    %c0_i32_1 = arith.constant 0 : i32
    %c0_i32_2 = arith.constant 0 : i32
    return %c0_i32, %c0_i32_0, %c0_i32_1 : i32, i32, i32
  }
  func.func @transform_4(%arg0: i32) -> (i32, i32) {
    %c0_i32 = arith.constant 0 : i32
    %c0_i32_0 = arith.constant 0 : i32
    %c0_i32_1 = arith.constant 0 : i32
    return %c0_i32, %c0_i32_0 : i32, i32
  }
  func.func @transform_5(%arg0: i32) -> (i32, i32, i32) {
    %c0_i32 = arith.constant 0 : i32
    %c0_i32_0 = arith.constant 0 : i32
    %c0_i32_1 = arith.constant 0 : i32
    return %arg0, %c0_i32, %c0_i32_0 : i32, i32, i32
  }
}

</mosaic_0001>

<llo_original>
// kernel: tile.13
$region0: #{tile.13}
  #allocation0 [shape = 's32[1]{0}', space=sflag, size = 0x4, scoped, tag = 'scoped memory for tile.13']
  %s0 = inlined_call_operand.vmem [shape: f32[8], index: 0, kind: input, shape index: {}]
  %s1 = inlined_call_operand.vmem [shape: f32[16,8], index: 1, kind: output, shape index: {}]
  // Predicated region
  $region2: #{tile.13} parent=0 // pred_check
    _
  $region3: #{tile.13} parent=0 // pred_check_branch
    %3 = sbr.rel (0) target = $region5
  $region4: #{tile.13} parent=0 // pred_region
    _
  $region5: #{tile.13} parent=0 // pred_fallthru
    _
  %v4 = vld [vmem:[%s0] ss:$0 sm:$0xff]
  %5 = vst [vmem:[%s1] sm:$0xff] %v4
  %s6 = scalar_lea.vmem %s1, 8
  %7 = vst [vmem:[%s6] sm:$0xff] %v4

// kernel: tile.14
$region0: #{tile.14}
  %s0 = inlined_call_operand.vmem [shape: f32[16,8], index: 0, kind: input, shape index: {}]
  %s1 = inlined_call_operand.vmem [shape: f32[1,128], index: 1, kind: output, shape index: {}]
  $region1: #{tile.14} parent=0
    #allocation0 [shape = 'u8[4096]{0}', space=vmem, size = 0x1000, scoped, tag = 'scoped mem for output reshape']
    %v2 = vld [vmem:[%s0] sm:$0x1]
    %vm3 = vcmask 64512
    %4 = vst.msk [vmem:[#allocation0] sm:$0x1] %vm3, %v2
    %s5 = scalar_lea.vmem %s0, 15
    %v6 = vld [vmem:[%s5] sm:$0x1]
    %7 = vrot.lane.b32.xlu0 %v6, 120
    %v8 = vpop.permute.xlu0 %7
    %vm9 = vcmask 1048512
    %10 = vst.msk [vmem:[#allocation0] sm:$0x1] %vm9, %v8
    %s11 = scalar_lea.vmem %s0, 14
    %v12 = vld [vmem:[%s11] sm:$0x1]
    %13 = vrot.lane.b32.xlu0 %v12, 112
    %v14 = vpop.permute.xlu0 %13
    %vm15 = vcmask 982912
    %16 = vst.msk [vmem:[#allocation0] sm:$0x1] %vm15, %v14
    %s17 = scalar_lea.vmem %s0, 13
    %v18 = vld [vmem:[%s17] sm:$0x1]
    %19 = vrot.lane.b32.xlu0 %v18, 104
    %v20 = vpop.permute.xlu0 %19
    %vm21 = vcmask 917312
    %22 = vst.msk [vmem:[#allocation0] sm:$0x1] %vm21, %v20
    %s23 = scalar_lea.vmem %s0, 12
    %v24 = vld [vmem:[%s23] sm:$0x1]
    %25 = vrot.lane.b32.xlu0 %v24, 96
    %v26 = vpop.permute.xlu0 %25
    %vm27 = vcmask 851712
    %28 = vst.msk [vmem:[#allocation0] sm:$0x1] %vm27, %v26
    %s29 = scalar_lea.vmem %s0, 11
    %v30 = vld [vmem:[%s29] sm:$0x1]
    %31 = vrot.lane.b32.xlu0 %v30, 88
    %v32 = vpop.permute.xlu0 %31
    %vm33 = vcmask 786112
    %34 = vst.msk [vmem:[#allocation0] sm:$0x1] %vm33, %v32
    %s35 = scalar_lea.vmem %s0, 10
    %v36 = vld [vmem:[%s35] sm:$0x1]
    %37 = vrot.lane.b32.xlu0 %v36, 80
    %v38 = vpop.permute.xlu0 %37
    %vm39 = vcmask 720512
    %40 = vst.msk [vmem:[#allocation0] sm:$0x1] %vm39, %v38
    %s41 = scalar_lea.vmem %s0, 9
    %v42 = vld [vmem:[%s41] sm:$0x1]
    %43 = vrot.lane.b32.xlu0 %v42, 72
    %v44 = vpop.permute.xlu0 %43
    %vm45 = vcmask 654912
    %46 = vst.msk [vmem:[#allocation0] sm:$0x1] %vm45, %v44
    %s47 = scalar_lea.vmem %s0, 8
    %v48 = vld [vmem:[%s47] sm:$0x1]
    %49 = vrot.lane.b32.xlu0 %v48, 64
    %v50 = vpop.permute.xlu0 %49
    %vm51 = vcmask 589312
    %52 = vst.msk [vmem:[#allocation0] sm:$0x1] %vm51, %v50
    %s53 = scalar_lea.vmem %s0, 7
    %v54 = vld [vmem:[%s53] sm:$0x1]
    %55 = vrot.lane.b32.xlu0 %v54, 56
    %v56 = vpop.permute.xlu0 %55
    %vm57 = vcmask 523712
    %58 = vst.msk [vmem:[#allocation0] sm:$0x1] %vm57, %v56
    %s59 = scalar_lea.vmem %s0, 6
    %v60 = vld [vmem:[%s59] sm:$0x1]
    %61 = vrot.lane.b32.xlu0 %v60, 48
    %v62 = vpop.permute.xlu0 %61
    %vm63 = vcmask 458112
    %64 = vst.msk [vmem:[#allocation0] sm:$0x1] %vm63, %v62
    %s65 = scalar_lea.vmem %s0, 5
    %v66 = vld [vmem:[%s65] sm:$0x1]
    %67 = vrot.lane.b32.xlu0 %v66, 40
    %v68 = vpop.permute.xlu0 %67
    %vm69 = vcmask 392512
    %70 = vst.msk [vmem:[#allocation0] sm:$0x1] %vm69, %v68
    %s71 = scalar_lea.vmem %s0, 4
    %v72 = vld [vmem:[%s71] sm:$0x1]
    %73 = vrot.lane.b32.xlu0 %v72, 32
    %v74 = vpop.permute.xlu0 %73
    %vm75 = vcmask 326912
    %76 = vst.msk [vmem:[#allocation0] sm:$0x1] %vm75, %v74
    %s77 = scalar_lea.vmem %s0, 3
    %v78 = vld [vmem:[%s77] sm:$0x1]
    %79 = vrot.lane.b32.xlu0 %v78, 24
    %v80 = vpop.permute.xlu0 %79
    %vm81 = vcmask 261312
    %82 = vst.msk [vmem:[#allocation0] sm:$0x1] %vm81, %v80
    %s83 = scalar_lea.vmem %s0, 2
    %v84 = vld [vmem:[%s83] sm:$0x1]
    %85 = vrot.lane.b32.xlu0 %v84, 16
    %v86 = vpop.permute.xlu0 %85
    %vm87 = vcmask 195712
    %88 = vst.msk [vmem:[#allocation0] sm:$0x1] %vm87, %v86
    %s89 = scalar_lea.vmem %s0, 1
    %v90 = vld [vmem:[%s89] sm:$0x1]
    %91 = vrot.lane.b32.xlu0 %v90, 8
    %v92 = vpop.permute.xlu0 %91
    %vm93 = vcmask 130112
    %94 = vst.msk [vmem:[#allocation0] sm:$0x1] %vm93, %v92
    %s96 = sshllo.u32 0, 1
    %v98 = vld [vmem:[#allocation0] sm:%s96]
    %s99 = sshllo.u32 0, 1
    %100 = vst [vmem:[%s1] sm:%s99] %v98

// kernel: double_conv_forward.1
$region0: #{double_conv_forward.1}
  #allocation0 [shape = 'u32[]', space=smem, size = 0x4, offset = 0x4, fixed_abs, tag = 'smem constant byte address 0x4 - core index']
  #allocation1 [shape = 'u32[144,128]{1,0:T(1,128)}', space=vmem, size = 0x12000, scoped, tag = 'internal scratch']
  #allocation2 [shape = 'bf16[1,18,64]{2,1,0:T(8,128)(2,1)}', space=vmem, size = 0x1800, scoped, tag = 'scratch operand']
  #allocation3 [shape = 'bf16[1,18,128]{2,1,0:T(8,128)(2,1)}', space=vmem, size = 0x1800, scoped, tag = 'scratch operand']
  %s0 = inlined_call_operand.vmem [shape: bf16[2,16,64], index: 0, kind: input, shape index: {}]
  %s1 = inlined_call_operand.vmem [shape: bf16[3,64,128], index: 1, kind: input, shape index: {}]
  %s2 = inlined_call_operand.vmem [shape: f32[1,128], index: 2, kind: input, shape index: {}]
  %s3 = inlined_call_operand.vmem [shape: bf16[3,128,128], index: 3, kind: input, shape index: {}]
  %s4 = inlined_call_operand.vmem [shape: f32[1,128], index: 4, kind: input, shape index: {}]
  %s5 = inlined_call_operand.vmem [shape: bf16[2,16,128], index: 5, kind: output, shape index: {}]
  %s6 = sld [smem:[#allocation0]]
  $region53: #{double_conv_forward.1} parent=0
    _
  %s8 = ssub.s32 1, %s6
  %s9 = scalar_select 0, %s8, %s6
  loop: start=0, step=1, limit=4
  $region2: #{double_conv_forward.1} parent=0 // loop_pre_header
    _
  $region3: #{double_conv_forward.1} parent=0 // loop_header
    %s11 = sphi 0, %s15
    %p12 = scmp.ge.s32.totalorder %s11, 4
    %s21 = sphi 0, %s23
    %s24 = sphi 0, %s21
    %s25 = sphi 0, %s24
    %s41 = sphi 0, %s25
    %s45 = sphi 0, %s45
    %s47 = sphi 0, %s45
    %s48 = sphi 0, %s47
    %s62 = sphi 0, %s48
    %s66 = sphi 0, %s66
    %s68 = sphi 0, %s66
    %s69 = sphi 0, %s68
    %s83 = sphi 0, %s69
    %s87 = sphi 0, %s87
    %s89 = sphi 0, %s87
    %s90 = sphi 0, %s89
    %s104 = sphi 0, %s90
    %s108 = sphi 0, %s108
    %s110 = sphi 0, %s108
    %s111 = sphi 0, %s110
    %s125 = sphi 0, %s111
    %s131 = sphi 0, %s133
    %s134 = sphi 0, %s131
    %s135 = sphi 0, %s134
    %s151 = sphi 0, %s135
  $region4: #{double_conv_forward.1} parent=0 // loop_header_branch
    %14 = sbr.rel (%p12) target = $region8
  $region5: #{double_conv_forward.1} parent=0 // loop_body
    %s16 = ssub.s32 %s11, 1
    %s17 = ssub.s32 %s11, 2
    %s18 = sadd.s32 %s11, 1
    %s19 = ssub.s32 %s11, %s18
    %p20 = scmp.eq.s32.totalorder %s19, 0
    %s22 = sadd.s32 %s21, 1
    %s23 = scalar_select %p20, %s21, %s22
    %p26 = pneg %p20
    %p27 = scmp.eq.s32.totalorder %s11, 1
    %p28 = por %p26, %p27
    %p29 = scmp.ne.s32.totalorder %s21, %s24
    %p30 = scmp.eq.s32.totalorder %s11, 0
    %p31 = por %p29, %p30
    %p32 = scmp.ne.s32.totalorder %s21, %s24
    %p33 = scmp.eq.s32.totalorder %s16, 1
    %p34 = por %p32, %p33
    %p35 = scmp.ne.s32.totalorder %s24, %s25
    %p36 = scmp.eq.s32.totalorder %s16, 0
    %p37 = por %p35, %p36
    %p38 = scmp.ne.s32.totalorder %s24, %s25
    %p39 = scmp.eq.s32.totalorder %s17, 1
    %p40 = por %p38, %p39
    %p42 = scmp.ne.s32.totalorder %s25, %s41
    %p43 = scmp.eq.s32.totalorder %s17, 0
    %p44 = por %p42, %p43
    %s46 = sadd.s32 %s45, 1
    %p49 = scmp.eq.s32.totalorder %s11, 1
    %p50 = scmp.ne.s32.totalorder %s45, %s47
    %p51 = scmp.eq.s32.totalorder %s11, 0
    %p52 = por %p50, %p51
    %p53 = scmp.ne.s32.totalorder %s45, %s47
    %p54 = scmp.eq.s32.totalorder %s16, 1
    %p55 = por %p53, %p54
    %p56 = scmp.ne.s32.totalorder %s47, %s48
    %p57 = scmp.eq.s32.totalorder %s16, 0
    %p58 = por %p56, %p57
    %p59 = scmp.ne.s32.totalorder %s47, %s48
    %p60 = scmp.eq.s32.totalorder %s17, 1
    %p61 = por %p59, %p60
    %p63 = scmp.ne.s32.totalorder %s48, %s62
    %p64 = scmp.eq.s32.totalorder %s17, 0
    %p65 = por %p63, %p64
    %s67 = sadd.s32 %s66, 1
    %p70 = scmp.eq.s32.totalorder %s11, 1
    %p71 = scmp.ne.s32.totalorder %s66, %s68
    %p72 = scmp.eq.s32.totalorder %s11, 0
    %p73 = por %p71, %p72
    %p74 = scmp.ne.s32.totalorder %s66, %s68
    %p75 = scmp.eq.s32.totalorder %s16, 1
    %p76 = por %p74, %p75
    %p77 = scmp.ne.s32.totalorder %s68, %s69
    %p78 = scmp.eq.s32.totalorder %s16, 0
    %p79 = por %p77, %p78
    %p80 = scmp.ne.s32.totalorder %s68, %s69
    %p81 = scmp.eq.s32.totalorder %s17, 1
    %p82 = por %p80, %p81
    %p84 = scmp.ne.s32.totalorder %s69, %s83
    %p85 = scmp.eq.s32.totalorder %s17, 0
    %p86 = por %p84, %p85
    %s88 = sadd.s32 %s87, 1
    %p91 = scmp.eq.s32.totalorder %s11, 1
    %p92 = scmp.ne.s32.totalorder %s87, %s89
    %p93 = scmp.eq.s32.totalorder %s11, 0
    %p94 = por %p92, %p93
    %p95 = scmp.ne.s32.totalorder %s87, %s89
    %p96 = scmp.eq.s32.totalorder %s16, 1
    %p97 = por %p95, %p96
    %p98 = scmp.ne.s32.totalorder %s89, %s90
    %p99 = scmp.eq.s32.totalorder %s16, 0
    %p100 = por %p98, %p99
    %p101 = scmp.ne.s32.totalorder %s89, %s90
    %p102 = scmp.eq.s32.totalorder %s17, 1
    %p103 = por %p101, %p102
    %p105 = scmp.ne.s32.totalorder %s90, %s104
    %p106 = scmp.eq.s32.totalorder %s17, 0
    %p107 = por %p105, %p106
    %s109 = sadd.s32 %s108, 1
    %p112 = scmp.eq.s32.totalorder %s11, 1
    %p113 = scmp.ne.s32.totalorder %s108, %s110
    %p114 = scmp.eq.s32.totalorder %s11, 0
    %p115 = por %p113, %p114
    %p116 = scmp.ne.s32.totalorder %s108, %s110
    %p117 = scmp.eq.s32.totalorder %s16, 1
    %p118 = por %p116, %p117
    %p119 = scmp.ne.s32.totalorder %s110, %s111
    %p120 = scmp.eq.s32.totalorder %s16, 0
    %p121 = por %p119, %p120
    %p122 = scmp.ne.s32.totalorder %s110, %s111
    %p123 = scmp.eq.s32.totalorder %s17, 1
    %p124 = por %p122, %p123
    %p126 = scmp.ne.s32.totalorder %s111, %s125
    %p127 = scmp.eq.s32.totalorder %s17, 0
    %p128 = por %p126, %p127
    %s129 = ssub.s32 %s11, %s18
    %p130 = scmp.eq.s32.totalorder %s129, 0
    %s132 = sadd.s32 %s131, 1
    %s133 = scalar_select %p130, %s131, %s132
    %p136 = pneg %p130
    %p137 = scmp.eq.s32.totalorder %s11, 1
    %p138 = por %p136, %p137
    %p139 = scmp.ne.s32.totalorder %s131, %s134
    %p140 = scmp.eq.s32.totalorder %s11, 0
    %p141 = por %p139, %p140
    %p142 = scmp.ne.s32.totalorder %s131, %s134
    %p143 = scmp.eq.s32.totalorder %s16, 1
    %p144 = por %p142, %p143
    %p145 = scmp.ne.s32.totalorder %s134, %s135
    %p146 = scmp.eq.s32.totalorder %s16, 0
    %p147 = por %p145, %p146
    %p148 = scmp.ne.s32.totalorder %s134, %s135
    %p149 = scmp.eq.s32.totalorder %s17, 1
    %p150 = por %p148, %p149
    %p152 = scmp.ne.s32.totalorder %s135, %s151
    %p153 = scmp.eq.s32.totalorder %s17, 0
    %p154 = por %p152, %p153
    %p155 = scmp.le.s32.totalorder 1, %s11
    %p156 = scmp.lt.s32.totalorder %s11, 3
    %p157 = pnand %p155, %p156
    %p158 = pneg %p157
    // Predicated region
    $region9: #{double_conv_forward.1} parent=5 // pred_check
      _
    $region10: #{double_conv_forward.1} parent=5 // pred_check_branch
      %160 = sbr.rel (%p157) target = $region12
    $region11: #{double_conv_forward.1} parent=5 // pred_region
      %s161 = ssub.s32 %s11, 1
      // Predicated region
      $region13: #{double_conv_forward.1} parent=11 // pred_check
        %p162 = pneg %p58
      $region14: #{double_conv_forward.1} parent=11 // pred_check_branch
        %164 = sbr.rel (%p162) target = $region16
      $region15: #{double_conv_forward.1} parent=11 // pred_region
        _
      $region16: #{double_conv_forward.1} parent=11 // pred_fallthru
        _
      // Predicated region
      $region17: #{double_conv_forward.1} parent=11 // pred_check
        %p165 = pneg %p79
      $region18: #{double_conv_forward.1} parent=11 // pred_check_branch
        %167 = sbr.rel (%p165) target = $region20
      $region19: #{double_conv_forward.1} parent=11 // pred_region
        _
      $region20: #{double_conv_forward.1} parent=11 // pred_fallthru
        _
      // Predicated region
      $region21: #{double_conv_forward.1} parent=11 // pred_check
        %p168 = pneg %p100
      $region22: #{double_conv_forward.1} parent=11 // pred_check_branch
        %170 = sbr.rel (%p168) target = $region24
      $region23: #{double_conv_forward.1} parent=11 // pred_region
        _
      $region24: #{double_conv_forward.1} parent=11 // pred_fallthru
        _
      // Predicated region
      $region25: #{double_conv_forward.1} parent=11 // pred_check
        %p171 = pneg %p121
      $region26: #{double_conv_forward.1} parent=11 // pred_check_branch
        %173 = sbr.rel (%p171) target = $region28
      $region27: #{double_conv_forward.1} parent=11 // pred_region
        _
      $region28: #{double_conv_forward.1} parent=11 // pred_fallthru
        _
    $region12: #{double_conv_forward.1} parent=5 // pred_fallthru
      _
    %p174 = scmp.lt.s32.totalorder %s11, 2
    // Predicated region
    $region29: #{double_conv_forward.1} parent=5 // pred_check
      %p175 = pneg %p174
    $region30: #{double_conv_forward.1} parent=5 // pred_check_branch
      %177 = sbr.rel (%p175) target = $region32
    $region31: #{double_conv_forward.1} parent=5 // pred_region
      // Predicated region
      $region33: #{double_conv_forward.1} parent=31 // pred_check
        %p178 = pneg %p31
      $region34: #{double_conv_forward.1} parent=31 // pred_check_branch
        %180 = sbr.rel (%p178) target = $region36
      $region35: #{double_conv_forward.1} parent=31 // pred_region
        %p181 = scmp.lt.s32.totalorder %s11, 1
        %s182 = scalar_select %p181, %s11, 1
        %s183 = smul.addr %s182, 2
        %s184 = smul.addr %s183, 4
        %s185 = scalar_lea.vmem %s0, %s184
      $region36: #{double_conv_forward.1} parent=31 // pred_fallthru
        _
    $region32: #{double_conv_forward.1} parent=5 // pred_fallthru
      _
    %p186 = scmp.le.s32.totalorder 1, %s11
    %p187 = scmp.lt.s32.totalorder %s11, 3
    %p188 = pnand %p186, %p187
    %p189 = pneg %p188
    // Predicated region
    $region37: #{double_conv_forward.1} parent=5 // pred_check
      _
    $region38: #{double_conv_forward.1} parent=5 // pred_check_branch
      %191 = sbr.rel (%p188) target = $region40
    $region39: #{double_conv_forward.1} parent=5 // pred_region
      %s192 = ssub.s32 %s11, 1
      %p193 = scmp.lt.s32.totalorder %s16, 1
      %s194 = scalar_select %p193, %s16, 1
      %s195 = smul.addr %s194, 2
      %s196 = smul.addr %s195, 4
      %s197 = scalar_lea.vmem %s0, %s196
      %p198 = pneg %p37
      %p199 = pneg %p34
      %p200 = pneg %p58
      %p201 = pneg %p55
      %p202 = pneg %p79
      %p203 = pneg %p76
      %p204 = pneg %p100
      %p205 = pneg %p97
      %p206 = pneg %p121
      %p207 = pneg %p118
      %p208 = pneg %p147
      %p209 = pneg %p144
      %p210 = scmp.lt.s32.totalorder %s16, 1
      %s211 = scalar_select %p210, %s16, 1
      %s212 = smul.addr %s211, 2
      %s213 = smul.addr %s212, 4
      %s214 = scalar_lea.vmem %s5, %s213
      %p215 = scmp.lt.s32.totalorder %s16, 1
      %s216 = scalar_select %p215, %s16, 1
      %s217 = smul.addr %s216, 2
      %s218 = smul.addr %s217, 4
      %s219 = scalar_lea.vmem %s0, %s218
      %p220 = scmp.lt.s32.totalorder %s16, 1
      %s221 = scalar_select %p220, %s16, 1
      %s222 = smul.addr %s221, 2
      %s223 = smul.addr %s222, 4
      %s224 = scalar_lea.vmem %s5, %s223
      %vm226 = vcmask 516096
      %vm227 = vsmask.f32 256
      %vm228 = vmand %vm226, %vm227
      %v229 = vld [vmem:[#allocation2] sm:$0x1]
      %v230 = vsel %vm228, 0, %v229
      %231 = vst [vmem:[#allocation2] sm:$0x1] %v230
      %vm232 = vsmask.f32 7938
      %vm233 = vmand %vm226, %vm232
      %v234 = vld [vmem:[#allocation2 + $0x8] sm:$0x1]
      %v235 = vsel %vm233, 0, %v234
      %236 = vst [vmem:[#allocation2 + $0x8] sm:$0x1] %v235
      %vm237 = vcmask 1040384
      %vm238 = vmand %vm237, %vm227
      %v239 = vld [vmem:[#allocation3] sm:$0x1]
      %v240 = vsel %vm238, 0, %v239
      %241 = vst [vmem:[#allocation3] sm:$0x1] %v240
      %vm242 = vmand %vm237, %vm232
      %v243 = vld [vmem:[#allocation3 + $0x8] sm:$0x1]
      %v244 = vsel %vm242, 0, %v243
      %245 = vst [vmem:[#allocation3 + $0x8] sm:$0x1] %v244
      %v246 = vld [vmem:[%s219] sm:$0xf]
      %v247 = vld [vmem:[%s219 + $0x4] sm:$0xf]
      %vm248 = vsmask.f32 4368
      %vm249 = vmor %vm227, %vm248
      %v251 = vshrl.u32 %v246, 16
      %v253 = vrot.slane %v251, 7
      %v254 = vshll.u32 %v246, 16
      %v256 = vor.u32 %v253, %v254
      %v257 = vrot.slane %v253, 4
      %v259 = vshrl.u32 %v247, 16
      %v261 = vrot.slane %v259, 7
      %v262 = vshll.u32 %v247, 16
      %v264 = vor.u32 %v261, %v262
      %v265 = vsel %vm249, %v257, %v264
      %v266 = vrot.slane %v261, 4
      %vm270 = vcmask 519168
      %vm271 = vmand %vm270, %vm232
      %v272 = vld [vmem:[#allocation2] sm:$0xf]
      %v273 = vsel %vm271, %v256, %v272
      %274 = vst [vmem:[#allocation2] sm:$0xf] %v273
      %vm275 = vcmask 519168
      %276 = vst.msk [vmem:[#allocation2 + $0x4] sm:$0xf] %vm275, %v265
      %v277 = vld [vmem:[#allocation2 + $0x8] sm:$0x1]
      %v278 = vsel %vm228, %v266, %v277
      %279 = vst [vmem:[#allocation2 + $0x8] sm:$0x1] %v278
      %v280 = vld [vmem:[#allocation2] sm:$0xf]
      %v281 = vld [vmem:[#allocation2 + $0x4] sm:$0xf]
      %v282 = vld [vmem:[%s1] sm:$0xf]
      %v283 = vld [vmem:[%s1 + $0x4] sm:$0xf]
      %v284 = vld [vmem:[%s1 + $0x8] sm:$0xf]
      %v285 = vld [vmem:[%s1 + $0xc] sm:$0xf]
      %v286 = vld [vmem:[%s1 + $0x10] sm:$0xf]
      %v287 = vld [vmem:[%s1 + $0x14] sm:$0xf]
      %v288 = vld [vmem:[%s1 + $0x18] sm:$0xf]
      %v289 = vld [vmem:[%s1 + $0x1c] sm:$0xf]
      %v290 = vld [vmem:[#allocation2 + $0x8] sm:$0x1]
      %s291 = scalar_lea.vmem %s1, 32
      %v292 = vld [vmem:[%s291] sm:$0xf]
      %v293 = vld [vmem:[%s291 + $0x4] sm:$0xf]
      %v294 = vld [vmem:[%s291 + $0x8] sm:$0xf]
      %v295 = vld [vmem:[%s291 + $0xc] sm:$0xf]
      %v296 = vld [vmem:[%s291 + $0x10] sm:$0xf]
      %v297 = vld [vmem:[%s291 + $0x14] sm:$0xf]
      %v298 = vld [vmem:[%s291 + $0x18] sm:$0xf]
      %v299 = vld [vmem:[%s291 + $0x1c] sm:$0xf]
      %v303 = vunpack.c.l.b16 %v280
      %v304 = vunpack.c.l.b16 %v281
      %v305 = vunpack.c.l.b16 %v290
      %v306 = vpack.c.b16 %v304, %v303
      %v307 = vpack.c.b16 %v305, %v305
      %vm308 = vsmask.f32 7424
      %v310 = vshrl.u32 %v306, 16
      %v312 = vshll.u32 %v306, 16
      %v314 = vrot.slane %v312, 1
      %v315 = vor.u32 %v310, %v314
      %v317 = vshll.u32 %v307, 16
      %v319 = vrot.slane %v317, 1
      %v320 = vsel %vm308, %v315, %v319
      %v329 = vunpack.c.l.b16 %v292
      %v330 = vunpack.c.l.b16 %v293
      %v331 = vunpack.c.l.b16 %v294
      %v332 = vunpack.c.l.b16 %v295
      %v333 = vunpack.c.l.b16 %v296
      %v334 = vunpack.c.l.b16 %v297
      %v335 = vunpack.c.l.b16 %v298
      %v336 = vunpack.c.l.b16 %v299
      %v337 = vpack.c.b16 %v330, %v329
      %v338 = vpack.c.b16 %v332, %v331
      %v339 = vpack.c.b16 %v334, %v333
      %v340 = vpack.c.b16 %v336, %v335
      %vm345 = vcmask 523264
      %v347 = vsel %vm345, %v320, 0
      %349 = vmatprep.subr.bf16.mxu0 0
      %350 = vmatpush1.bf16.msra.mxu0 %v337
      %351 = vmatprep.subr.bf16.mxu0 0
      %352 = vmatpush1.bf16.msra.mxu0 %v338
      %353 = vmatprep.subr.bf16.mxu0 0
      %354 = vmatpush1.bf16.msra.mxu0 %v339
      %355 = vmatprep.subr.bf16.mxu0 0
      %356 = vmatpush1.bf16.msra.mxu0 %v340
      %357 = vmatprep.subr.bf16.mxu0 0
      %358 = vmatpush1.bf16.msra.mxu0 0
      %359 = vmatprep.subr.bf16.mxu0 0
      %360 = vmatpush1.bf16.msra.mxu0 0
      %361 = vmatprep.subr.bf16.mxu0 0
      %362 = vmatpush1.bf16.msra.mxu0 0
      %363 = vmatprep.subr.bf16.mxu0 0
      %364 = vmatpush1.bf16.msra.mxu0 0
      %365 = vmatprep.subr.bf16.mxu0 0
      %366 = vmatpush1.bf16.msra.mxu0 0
      %367 = vmatprep.subr.bf16.mxu0 0
      %368 = vmatpush1.bf16.msra.mxu0 0
      %369 = vmatprep.subr.bf16.mxu0 0
      %370 = vmatpush1.bf16.msra.mxu0 0
      %371 = vmatprep.subr.bf16.mxu0 0
      %372 = vmatpush1.bf16.msra.mxu0 0
      %373 = vmatprep.subr.bf16.mxu0 0
      %374 = vmatpush1.bf16.msra.mxu0 0
      %375 = vmatprep.subr.bf16.mxu0 0
      %376 = vmatpush1.bf16.msra.mxu0 0
      %377 = vmatprep.subr.bf16.mxu0 0
      %378 = vmatpush1.bf16.msra.mxu0 0
      %379 = vmatprep.subr.bf16.mxu0 0
      %380 = vmatpush1.bf16.msra.mxu0 0
      %381 = vmatprep.mubr.bf16.mxu0 0
      %382 = vmatmul.mubr.bf16.gmra.mrb[0].mxu0 %v347
      %v383 = vpop.f32.mrb[0].mxu0
      %v384 = vadd.f32 0.0, %v383
      %v385 = vpop.f32.mrb[0].mxu0
      %v386 = vpop.f32.mrb[0].mxu0
      %v387 = vadd.f32 0.0, %v386
      %v388 = vpop.f32.mrb[0].mxu0
      %389 = vdwg.mxu0
      %v398 = vunpack.c.l.b16 %v282
      %v399 = vunpack.c.l.b16 %v283
      %v400 = vunpack.c.l.b16 %v284
      %v401 = vunpack.c.l.b16 %v285
      %v402 = vunpack.c.l.b16 %v286
      %v403 = vunpack.c.l.b16 %v287
      %v404 = vunpack.c.l.b16 %v288
      %v405 = vunpack.c.l.b16 %v289
      %v406 = vpack.c.b16 %v399, %v398
      %v407 = vpack.c.b16 %v401, %v400
      %v408 = vpack.c.b16 %v403, %v402
      %v409 = vpack.c.b16 %v405, %v404
      %v414 = vsel %vm345, %v306, 0
      %416 = vmatprep.subr.bf16.mxu0 0
      %417 = vmatpush1.bf16.msra.mxu0 %v406
      %418 = vmatprep.subr.bf16.mxu0 0
      %419 = vmatpush1.bf16.msra.mxu0 %v407
      %420 = vmatprep.subr.bf16.mxu0 0
      %421 = vmatpush1.bf16.msra.mxu0 %v408
      %422 = vmatprep.subr.bf16.mxu0 0
      %423 = vmatpush1.bf16.msra.mxu0 %v409
      %424 = vmatprep.subr.bf16.mxu0 0
      %425 = vmatpush1.bf16.msra.mxu0 0
      %426 = vmatprep.subr.bf16.mxu0 0
      %427 = vmatpush1.bf16.msra.mxu0 0
      %428 = vmatprep.subr.bf16.mxu0 0
      %429 = vmatpush1.bf16.msra.mxu0 0
      %430 = vmatprep.subr.bf16.mxu0 0
      %431 = vmatpush1.bf16.msra.mxu0 0
      %432 = vmatprep.subr.bf16.mxu0 0
      %433 = vmatpush1.bf16.msra.mxu0 0
      %434 = vmatprep.subr.bf16.mxu0 0
      %435 = vmatpush1.bf16.msra.mxu0 0
      %436 = vmatprep.subr.bf16.mxu0 0
      %437 = vmatpush1.bf16.msra.mxu0 0
      %438 = vmatprep.subr.bf16.mxu0 0
      %439 = vmatpush1.bf16.msra.mxu0 0
      %440 = vmatprep.subr.bf16.mxu0 0
      %441 = vmatpush1.bf16.msra.mxu0 0
      %442 = vmatprep.subr.bf16.mxu0 0
      %443 = vmatpush1.bf16.msra.mxu0 0
      %444 = vmatprep.subr.bf16.mxu0 0
      %445 = vmatpush1.bf16.msra.mxu0 0
      %446 = vmatprep.subr.bf16.mxu0 0
      %447 = vmatpush1.bf16.msra.mxu0 0
      %448 = vmatprep.mubr.bf16.mxu0 0
      %449 = vmatmul.mubr.bf16.gmra.mrb[0].mxu0 %v414
      %v450 = vpop.f32.mrb[0].mxu0
      %v451 = vadd.f32 %v384, %v450
      %v452 = vpop.f32.mrb[0].mxu0
      %v453 = vpop.f32.mrb[0].mxu0
      %v454 = vadd.f32 %v387, %v453
      %v455 = vpop.f32.mrb[0].mxu0
      %456 = vdwg.mxu0
      %v457 = vld [vmem:[#allocation2] sm:$0xe]
      %s458 = scalar_lea.vmem %s1, 64
      %v459 = vld [vmem:[%s458] sm:$0xf]
      %v460 = vld [vmem:[%s458 + $0x4] sm:$0xf]
      %v461 = vld [vmem:[%s458 + $0x8] sm:$0xf]
      %v462 = vld [vmem:[%s458 + $0xc] sm:$0xf]
      %v463 = vld [vmem:[%s458 + $0x10] sm:$0xf]
      %v464 = vld [vmem:[%s458 + $0x14] sm:$0xf]
      %v465 = vld [vmem:[%s458 + $0x18] sm:$0xf]
      %v466 = vld [vmem:[%s458 + $0x1c] sm:$0xf]
      %v468 = vunpack.c.l.b16 %v457
      %v469 = vpack.c.b16 %v304, %v468
      %vm470 = vcmask 1046528
      %v471 = vrot.slane %v469, 1
      %v472 = vrot.slane %v307, 1
      %v473 = vsel %vm470, %v471, %v472
      %v482 = vunpack.c.l.b16 %v459
      %v483 = vunpack.c.l.b16 %v460
      %v484 = vunpack.c.l.b16 %v461
      %v485 = vunpack.c.l.b16 %v462
      %v486 = vunpack.c.l.b16 %v463
      %v487 = vunpack.c.l.b16 %v464
      %v488 = vunpack.c.l.b16 %v465
      %v489 = vunpack.c.l.b16 %v466
      %v490 = vpack.c.b16 %v483, %v482
      %v491 = vpack.c.b16 %v485, %v484
      %v492 = vpack.c.b16 %v487, %v486
      %v493 = vpack.c.b16 %v489, %v488
      %v499 = vsel %vm345, %v473, 0
      %501 = vmatprep.subr.bf16.mxu0 0
      %502 = vmatpush1.bf16.msra.mxu0 %v490
      %503 = vmatprep.subr.bf16.mxu0 0
      %504 = vmatpush1.bf16.msra.mxu0 %v491
      %505 = vmatprep.subr.bf16.mxu0 0
      %506 = vmatpush1.bf16.msra.mxu0 %v492
      %507 = vmatprep.subr.bf16.mxu0 0
      %508 = vmatpush1.bf16.msra.mxu0 %v493
      %509 = vmatprep.subr.bf16.mxu0 0
      %510 = vmatpush1.bf16.msra.mxu0 0
      %511 = vmatprep.subr.bf16.mxu0 0
      %512 = vmatpush1.bf16.msra.mxu0 0
      %513 = vmatprep.subr.bf16.mxu0 0
      %514 = vmatpush1.bf16.msra.mxu0 0
      %515 = vmatprep.subr.bf16.mxu0 0
      %516 = vmatpush1.bf16.msra.mxu0 0
      %517 = vmatprep.subr.bf16.mxu0 0
      %518 = vmatpush1.bf16.msra.mxu0 0
      %519 = vmatprep.subr.bf16.mxu0 0
      %520 = vmatpush1.bf16.msra.mxu0 0
      %521 = vmatprep.subr.bf16.mxu0 0
      %522 = vmatpush1.bf16.msra.mxu0 0
      %523 = vmatprep.subr.bf16.mxu0 0
      %524 = vmatpush1.bf16.msra.mxu0 0
      %525 = vmatprep.subr.bf16.mxu0 0
      %526 = vmatpush1.bf16.msra.mxu0 0
      %527 = vmatprep.subr.bf16.mxu0 0
      %528 = vmatpush1.bf16.msra.mxu0 0
      %529 = vmatprep.subr.bf16.mxu0 0
      %530 = vmatpush1.bf16.msra.mxu0 0
      %531 = vmatprep.subr.bf16.mxu0 0
      %532 = vmatpush1.bf16.msra.mxu0 0
      %533 = vmatprep.mubr.bf16.mxu0 0
      %534 = vmatmul.mubr.bf16.gmra.mrb[0].mxu0 %v499
      %v535 = vpop.f32.mrb[0].mxu0
      %v536 = vadd.f32 0.0, %v535
      %v537 = vpop.f32.mrb[0].mxu0
      %v538 = vpop.f32.mrb[0].mxu0
      %v539 = vadd.f32 0.0, %v538
      %v540 = vpop.f32.mrb[0].mxu0
      %541 = vdwg.mxu0
      %v542 = vadd.f32 %v451, %v536
      %v543 = vadd.f32 %v454, %v539
      %v544 = vld [vmem:[%s2] sm:$0x1]
      %v546 = vlaneseq
      %v547 = vshrl.u32 %v546, 7
      %v548 = vsub.s32 0, %v547
      %v549 = vrot.slane %v544, %v548
      %v551 = vadd.f32 %v542, %v549
      %v552 = vadd.f32 %v543, %v549
      %v553 = vmax.f32 %v551, 0.0
      %v554 = vmax.f32 %v552, 0.0
      %v555 = vpack.c.bf16 %v554, %v553
      %v557 = vunpack.c.l.b16 %v555
      %v558 = vunpack.c.h.b16 %v555
      %v559 = vpack.c.b16 %v557, %v557
      %v560 = vpack.c.b16 %v558, %v558
      %v562 = vshrl.u32 %v559, 16
      %v564 = vrot.slane %v562, 7
      %v565 = vshll.u32 %v559, 16
      %v567 = vor.u32 %v564, %v565
      %v568 = vrot.slane %v564, 4
      %v570 = vshrl.u32 %v560, 16
      %v572 = vrot.slane %v570, 7
      %v573 = vshll.u32 %v560, 16
      %v575 = vor.u32 %v572, %v573
      %v576 = vsel %vm249, %v568, %v575
      %v577 = vrot.slane %v572, 4
      %vm581 = vcmask 1043456
      %vm582 = vmand %vm581, %vm232
      %v583 = vld [vmem:[#allocation3] sm:$0xf]
      %v584 = vsel %vm582, %v567, %v583
      %585 = vst [vmem:[#allocation3] sm:$0xf] %v584
      %586 = vst [vmem:[#allocation3 + $0x4] sm:$0xf] %v576
      %v587 = vld [vmem:[#allocation3 + $0x8] sm:$0x1]
      %v588 = vsel %vm238, %v577, %v587
      %589 = vst [vmem:[#allocation3 + $0x8] sm:$0x1] %v588
      %v590 = vld [vmem:[#allocation3] sm:$0xf]
      %v591 = vld [vmem:[#allocation3 + $0x4] sm:$0xf]
      %v592 = vld [vmem:[%s3] sm:$0xf]
      %v593 = vld [vmem:[%s3 + $0x4] sm:$0xf]
      %v594 = vld [vmem:[%s3 + $0x8] sm:$0xf]
      %v595 = vld [vmem:[%s3 + $0xc] sm:$0xf]
      %v596 = vld [vmem:[%s3 + $0x10] sm:$0xf]
      %v597 = vld [vmem:[%s3 + $0x14] sm:$0xf]
      %v598 = vld [vmem:[%s3 + $0x18] sm:$0xf]
      %v599 = vld [vmem:[%s3 + $0x1c] sm:$0xf]
      %v600 = vld [vmem:[%s3 + $0x20] sm:$0xf]
      %v601 = vld [vmem:[%s3 + $0x24] sm:$0xf]
      %v602 = vld [vmem:[%s3 + $0x28] sm:$0xf]
      %v603 = vld [vmem:[%s3 + $0x2c] sm:$0xf]
      %v604 = vld [vmem:[%s3 + $0x30] sm:$0xf]
      %v605 = vld [vmem:[%s3 + $0x34] sm:$0xf]
      %v606 = vld [vmem:[%s3 + $0x38] sm:$0xf]
      %v607 = vld [vmem:[%s3 + $0x3c] sm:$0xf]
      %v608 = vld [vmem:[#allocation3 + $0x8] sm:$0x1]
      %s609 = scalar_lea.vmem %s3, 64
      %v610 = vld [vmem:[%s609] sm:$0xf]
      %v611 = vld [vmem:[%s609 + $0x4] sm:$0xf]
      %v612 = vld [vmem:[%s609 + $0x8] sm:$0xf]
      %v613 = vld [vmem:[%s609 + $0xc] sm:$0xf]
      %v614 = vld [vmem:[%s609 + $0x10] sm:$0xf]
      %v615 = vld [vmem:[%s609 + $0x14] sm:$0xf]
      %v616 = vld [vmem:[%s609 + $0x18] sm:$0xf]
      %v617 = vld [vmem:[%s609 + $0x1c] sm:$0xf]
      %v618 = vld [vmem:[%s609 + $0x20] sm:$0xf]
      %v619 = vld [vmem:[%s609 + $0x24] sm:$0xf]
      %v620 = vld [vmem:[%s609 + $0x28] sm:$0xf]
      %v621 = vld [vmem:[%s609 + $0x2c] sm:$0xf]
      %v622 = vld [vmem:[%s609 + $0x30] sm:$0xf]
      %v623 = vld [vmem:[%s609 + $0x34] sm:$0xf]
      %v624 = vld [vmem:[%s609 + $0x38] sm:$0xf]
      %v625 = vld [vmem:[%s609 + $0x3c] sm:$0xf]
      %v629 = vunpack.c.l.b16 %v590
      %v630 = vunpack.c.l.b16 %v591
      %v631 = vunpack.c.l.b16 %v608
      %v632 = vpack.c.b16 %v630, %v629
      %v633 = vpack.c.b16 %v631, %v631
      %v635 = vshrl.u32 %v632, 16
      %v637 = vshll.u32 %v632, 16
      %v639 = vrot.slane %v637, 1
      %v640 = vor.u32 %v635, %v639
      %v642 = vshll.u32 %v633, 16
      %v644 = vrot.slane %v642, 1
      %v645 = vsel %vm308, %v640, %v644
      %v663 = vunpack.c.l.b16 %v610
      %v664 = vunpack.c.l.b16 %v611
      %v665 = vunpack.c.l.b16 %v612
      %v666 = vunpack.c.l.b16 %v613
      %v667 = vunpack.c.l.b16 %v614
      %v668 = vunpack.c.l.b16 %v615
      %v669 = vunpack.c.l.b16 %v616
      %v670 = vunpack.c.l.b16 %v617
      %v671 = vunpack.c.l.b16 %v618
      %v672 = vunpack.c.l.b16 %v619
      %v673 = vunpack.c.l.b16 %v620
      %v674 = vunpack.c.l.b16 %v621
      %v675 = vunpack.c.l.b16 %v622
      %v676 = vunpack.c.l.b16 %v623
      %v677 = vunpack.c.l.b16 %v624
      %v678 = vunpack.c.l.b16 %v625
      %v679 = vpack.c.b16 %v664, %v663
      %v680 = vpack.c.b16 %v666, %v665
      %v681 = vpack.c.b16 %v668, %v667
      %v682 = vpack.c.b16 %v670, %v669
      %v683 = vpack.c.b16 %v672, %v671
      %v684 = vpack.c.b16 %v674, %v673
      %v685 = vpack.c.b16 %v676, %v675
      %v686 = vpack.c.b16 %v678, %v677
      %695 = vmatprep.subr.bf16.mxu0 0
      %696 = vmatpush1.bf16.msra.mxu0 %v679
      %697 = vmatprep.subr.bf16.mxu0 0
      %698 = vmatpush1.bf16.msra.mxu0 %v680
      %699 = vmatprep.subr.bf16.mxu0 0
      %700 = vmatpush1.bf16.msra.mxu0 %v681
      %701 = vmatprep.subr.bf16.mxu0 0
      %702 = vmatpush1.bf16.msra.mxu0 %v682
      %703 = vmatprep.subr.bf16.mxu0 0
      %704 = vmatpush1.bf16.msra.mxu0 %v683
      %705 = vmatprep.subr.bf16.mxu0 0
      %706 = vmatpush1.bf16.msra.mxu0 %v684
      %707 = vmatprep.subr.bf16.mxu0 0
      %708 = vmatpush1.bf16.msra.mxu0 %v685
      %709 = vmatprep.subr.bf16.mxu0 0
      %710 = vmatpush1.bf16.msra.mxu0 %v686
      %711 = vmatprep.subr.bf16.mxu0 0
      %712 = vmatpush1.bf16.msra.mxu0 0
      %713 = vmatprep.subr.bf16.mxu0 0
      %714 = vmatpush1.bf16.msra.mxu0 0
      %715 = vmatprep.subr.bf16.mxu0 0
      %716 = vmatpush1.bf16.msra.mxu0 0
      %717 = vmatprep.subr.bf16.mxu0 0
      %718 = vmatpush1.bf16.msra.mxu0 0
      %719 = vmatprep.subr.bf16.mxu0 0
      %720 = vmatpush1.bf16.msra.mxu0 0
      %721 = vmatprep.subr.bf16.mxu0 0
      %722 = vmatpush1.bf16.msra.mxu0 0
      %723 = vmatprep.subr.bf16.mxu0 0
      %724 = vmatpush1.bf16.msra.mxu0 0
      %725 = vmatprep.subr.bf16.mxu0 0
      %726 = vmatpush1.bf16.msra.mxu0 0
      %727 = vmatprep.mubr.bf16.mxu0 0
      %728 = vmatmul.mubr.bf16.gmra.mrb[0].mxu0 %v645
      %v729 = vpop.f32.mrb[0].mxu0
      %v730 = vadd.f32 0.0, %v729
      %v731 = vpop.f32.mrb[0].mxu0
      %v732 = vpop.f32.mrb[0].mxu0
      %v733 = vadd.f32 0.0, %v732
      %v734 = vpop.f32.mrb[0].mxu0
      %735 = vdwg.mxu0
      %v753 = vunpack.c.l.b16 %v592
      %v754 = vunpack.c.l.b16 %v593
      %v755 = vunpack.c.l.b16 %v594
      %v756 = vunpack.c.l.b16 %v595
      %v757 = vunpack.c.l.b16 %v596
      %v758 = vunpack.c.l.b16 %v597
      %v759 = vunpack.c.l.b16 %v598
      %v760 = vunpack.c.l.b16 %v599
      %v761 = vunpack.c.l.b16 %v600
      %v762 = vunpack.c.l.b16 %v601
      %v763 = vunpack.c.l.b16 %v602
      %v764 = vunpack.c.l.b16 %v603
      %v765 = vunpack.c.l.b16 %v604
      %v766 = vunpack.c.l.b16 %v605
      %v767 = vunpack.c.l.b16 %v606
      %v768 = vunpack.c.l.b16 %v607
      %v769 = vpack.c.b16 %v754, %v753
      %v770 = vpack.c.b16 %v756, %v755
      %v771 = vpack.c.b16 %v758, %v757
      %v772 = vpack.c.b16 %v760, %v759
      %v773 = vpack.c.b16 %v762, %v761
      %v774 = vpack.c.b16 %v764, %v763
      %v775 = vpack.c.b16 %v766, %v765
      %v776 = vpack.c.b16 %v768, %v767
      %785 = vmatprep.subr.bf16.mxu0 0
      %786 = vmatpush1.bf16.msra.mxu0 %v769
      %787 = vmatprep.subr.bf16.mxu0 0
      %788 = vmatpush1.bf16.msra.mxu0 %v770
      %789 = vmatprep.subr.bf16.mxu0 0
      %790 = vmatpush1.bf16.msra.mxu0 %v771
      %791 = vmatprep.subr.bf16.mxu0 0
      %792 = vmatpush1.bf16.msra.mxu0 %v772
      %793 = vmatprep.subr.bf16.mxu0 0
      %794 = vmatpush1.bf16.msra.mxu0 %v773
      %795 = vmatprep.subr.bf16.mxu0 0
      %796 = vmatpush1.bf16.msra.mxu0 %v774
      %797 = vmatprep.subr.bf16.mxu0 0
      %798 = vmatpush1.bf16.msra.mxu0 %v775
      %799 = vmatprep.subr.bf16.mxu0 0
      %800 = vmatpush1.bf16.msra.mxu0 %v776
      %801 = vmatprep.subr.bf16.mxu0 0
      %802 = vmatpush1.bf16.msra.mxu0 0
      %803 = vmatprep.subr.bf16.mxu0 0
      %804 = vmatpush1.bf16.msra.mxu0 0
      %805 = vmatprep.subr.bf16.mxu0 0
      %806 = vmatpush1.bf16.msra.mxu0 0
      %807 = vmatprep.subr.bf16.mxu0 0
      %808 = vmatpush1.bf16.msra.mxu0 0
      %809 = vmatprep.subr.bf16.mxu0 0
      %810 = vmatpush1.bf16.msra.mxu0 0
      %811 = vmatprep.subr.bf16.mxu0 0
      %812 = vmatpush1.bf16.msra.mxu0 0
      %813 = vmatprep.subr.bf16.mxu0 0
      %814 = vmatpush1.bf16.msra.mxu0 0
      %815 = vmatprep.subr.bf16.mxu0 0
      %816 = vmatpush1.bf16.msra.mxu0 0
      %817 = vmatprep.mubr.bf16.mxu0 0
      %818 = vmatmul.mubr.bf16.gmra.mrb[0].mxu0 %v632
      %v819 = vpop.f32.mrb[0].mxu0
      %v820 = vadd.f32 %v730, %v819
      %v821 = vpop.f32.mrb[0].mxu0
      %v822 = vpop.f32.mrb[0].mxu0
      %v823 = vadd.f32 %v733, %v822
      %v824 = vpop.f32.mrb[0].mxu0
      %825 = vdwg.mxu0
      %v826 = vld [vmem:[#allocation3] sm:$0xe]
      %s827 = scalar_lea.vmem %s3, 128
      %v828 = vld [vmem:[%s827] sm:$0xf]
      %v829 = vld [vmem:[%s827 + $0x4] sm:$0xf]
      %v830 = vld [vmem:[%s827 + $0x8] sm:$0xf]
      %v831 = vld [vmem:[%s827 + $0xc] sm:$0xf]
      %v832 = vld [vmem:[%s827 + $0x10] sm:$0xf]
      %v833 = vld [vmem:[%s827 + $0x14] sm:$0xf]
      %v834 = vld [vmem:[%s827 + $0x18] sm:$0xf]
      %v835 = vld [vmem:[%s827 + $0x1c] sm:$0xf]
      %v836 = vld [vmem:[%s827 + $0x20] sm:$0xf]
      %v837 = vld [vmem:[%s827 + $0x24] sm:$0xf]
      %v838 = vld [vmem:[%s827 + $0x28] sm:$0xf]
      %v839 = vld [vmem:[%s827 + $0x2c] sm:$0xf]
      %v840 = vld [vmem:[%s827 + $0x30] sm:$0xf]
      %v841 = vld [vmem:[%s827 + $0x34] sm:$0xf]
      %v842 = vld [vmem:[%s827 + $0x38] sm:$0xf]
      %v843 = vld [vmem:[%s827 + $0x3c] sm:$0xf]
      %v845 = vunpack.c.l.b16 %v826
      %v846 = vpack.c.b16 %v630, %v845
      %v847 = vrot.slane %v846, 1
      %v848 = vrot.slane %v633, 1
      %v849 = vsel %vm470, %v847, %v848
      %v867 = vunpack.c.l.b16 %v828
      %v868 = vunpack.c.l.b16 %v829
      %v869 = vunpack.c.l.b16 %v830
      %v870 = vunpack.c.l.b16 %v831
      %v871 = vunpack.c.l.b16 %v832
      %v872 = vunpack.c.l.b16 %v833
      %v873 = vunpack.c.l.b16 %v834
      %v874 = vunpack.c.l.b16 %v835
      %v875 = vunpack.c.l.b16 %v836
      %v876 = vunpack.c.l.b16 %v837
      %v877 = vunpack.c.l.b16 %v838
      %v878 = vunpack.c.l.b16 %v839
      %v879 = vunpack.c.l.b16 %v840
      %v880 = vunpack.c.l.b16 %v841
      %v881 = vunpack.c.l.b16 %v842
      %v882 = vunpack.c.l.b16 %v843
      %v883 = vpack.c.b16 %v868, %v867
      %v884 = vpack.c.b16 %v870, %v869
      %v885 = vpack.c.b16 %v872, %v871
      %v886 = vpack.c.b16 %v874, %v873
      %v887 = vpack.c.b16 %v876, %v875
      %v888 = vpack.c.b16 %v878, %v877
      %v889 = vpack.c.b16 %v880, %v879
      %v890 = vpack.c.b16 %v882, %v881
      %899 = vmatprep.subr.bf16.mxu0 0
      %900 = vmatpush1.bf16.msra.mxu0 %v883
      %901 = vmatprep.subr.bf16.mxu0 0
      %902 = vmatpush1.bf16.msra.mxu0 %v884
      %903 = vmatprep.subr.bf16.mxu0 0
      %904 = vmatpush1.bf16.msra.mxu0 %v885
      %905 = vmatprep.subr.bf16.mxu0 0
      %906 = vmatpush1.bf16.msra.mxu0 %v886
      %907 = vmatprep.subr.bf16.mxu0 0
      %908 = vmatpush1.bf16.msra.mxu0 %v887
      %909 = vmatprep.subr.bf16.mxu0 0
      %910 = vmatpush1.bf16.msra.mxu0 %v888
      %911 = vmatprep.subr.bf16.mxu0 0
      %912 = vmatpush1.bf16.msra.mxu0 %v889
      %913 = vmatprep.subr.bf16.mxu0 0
      %914 = vmatpush1.bf16.msra.mxu0 %v890
      %915 = vmatprep.subr.bf16.mxu0 0
      %916 = vmatpush1.bf16.msra.mxu0 0
      %917 = vmatprep.subr.bf16.mxu0 0
      %918 = vmatpush1.bf16.msra.mxu0 0
      %919 = vmatprep.subr.bf16.mxu0 0
      %920 = vmatpush1.bf16.msra.mxu0 0
      %921 = vmatprep.subr.bf16.mxu0 0
      %922 = vmatpush1.bf16.msra.mxu0 0
      %923 = vmatprep.subr.bf16.mxu0 0
      %924 = vmatpush1.bf16.msra.mxu0 0
      %925 = vmatprep.subr.bf16.mxu0 0
      %926 = vmatpush1.bf16.msra.mxu0 0
      %927 = vmatprep.subr.bf16.mxu0 0
      %928 = vmatpush1.bf16.msra.mxu0 0
      %929 = vmatprep.subr.bf16.mxu0 0
      %930 = vmatpush1.bf16.msra.mxu0 0
      %931 = vmatprep.mubr.bf16.mxu0 0
      %932 = vmatmul.mubr.bf16.gmra.mrb[0].mxu0 %v849
      %v933 = vpop.f32.mrb[0].mxu0
      %v934 = vadd.f32 0.0, %v933
      %v935 = vpop.f32.mrb[0].mxu0
      %v936 = vpop.f32.mrb[0].mxu0
      %v937 = vadd.f32 0.0, %v936
      %v938 = vpop.f32.mrb[0].mxu0
      %939 = vdwg.mxu0
      %v940 = vadd.f32 %v820, %v934
      %v941 = vadd.f32 %v823, %v937
      %v942 = vld [vmem:[%s4] sm:$0x1]
      %v944 = vlaneseq
      %v945 = vshrl.u32 %v944, 7
      %v946 = vsub.s32 0, %v945
      %v947 = vrot.slane %v942, %v946
      %v949 = vadd.f32 %v940, %v947
      %v950 = vadd.f32 %v941, %v947
      %v951 = vmax.f32 %v949, 0.0
      %v952 = vmax.f32 %v950, 0.0
      %v953 = vpack.c.bf16 %v952, %v951
      %v955 = vunpack.c.l.b16 %v953
      %v956 = vunpack.c.h.b16 %v953
      %v957 = vpack.c.b16 %v955, %v955
      %v958 = vpack.c.b16 %v956, %v956
      %961 = vst [vmem:[%s224] sm:$0xf] %v957
      %962 = vst [vmem:[%s224 + $0x4] sm:$0xf] %v958
      %p963 = scmp.lt.s32.totalorder %s16, 1
      %s964 = scalar_select %p963, %s16, 1
      %s965 = smul.addr %s964, 2
      %s966 = smul.addr %s965, 4
      %s967 = scalar_lea.vmem %s5, %s966
      // Predicated region
      $region41: #{double_conv_forward.1} parent=39 // pred_check
        %p968 = pneg %p144
      $region42: #{double_conv_forward.1} parent=39 // pred_check_branch
        %970 = sbr.rel (%p968) target = $region44
      $region43: #{double_conv_forward.1} parent=39 // pred_region
        _
      $region44: #{double_conv_forward.1} parent=39 // pred_fallthru
        _
    $region40: #{double_conv_forward.1} parent=5 // pred_fallthru
      _
    %p971 = scmp.le.s32.totalorder 2, %s11
    // Predicated region
    $region45: #{double_conv_forward.1} parent=5 // pred_check
      %p972 = pneg %p971
    $region46: #{double_conv_forward.1} parent=5 // pred_check_branch
      %974 = sbr.rel (%p972) target = $region48
    $region47: #{double_conv_forward.1} parent=5 // pred_region
      %s975 = ssub.s32 %s11, 2
      // Predicated region
      $region49: #{double_conv_forward.1} parent=47 // pred_check
        %p976 = pneg %p150
      $region50: #{double_conv_forward.1} parent=47 // pred_check_branch
        %978 = sbr.rel (%p976) target = $region52
      $region51: #{double_conv_forward.1} parent=47 // pred_region
        %p979 = scmp.lt.s32.totalorder %s17, 1
        %s980 = scalar_select %p979, %s17, 1
        %s981 = smul.addr %s980, 2
        %s982 = smul.addr %s981, 4
        %s983 = scalar_lea.vmem %s5, %s982
      $region52: #{double_conv_forward.1} parent=47 // pred_fallthru
        _
    $region48: #{double_conv_forward.1} parent=5 // pred_fallthru
      _
  $region6: #{double_conv_forward.1} parent=0 // loop_footer
    %s15 = sadd.s32 1, %s11
  $region7: #{double_conv_forward.1} parent=0 // loop_footer_branch
    %10 = sbr.rel target = $region3
  $region8: #{double_conv_forward.1} parent=0 // loop_exit
    _

</llo_original>
